<compile_context>
chip_gen: v5e
topology: v5e:2x2
jax: 0.10.0
libtpu: 0.0.40
codegen_flags: <defaults>
</compile_context>

<pallas_src>
import jax
import jax.numpy as jnp
from jax.experimental import pallas as pl
from jax.experimental.pallas import tpu as pltpu

DIM = 512        # DropX2Fusion default `dim`
ROW_TILE = 2048  # rows (tokens) per grid step; clamped to T for small inputs


def _copy_kernel(x_ref, o_ref):
    # Pure pass-through of the current (row_tile, D) block.
    o_ref[...] = x_ref[...]


def dropx2_fusion_forward(x1, x2):
    """DropX2Fusion.forward — optimal path: pure identity on x1.

    The module never reads x2 and applies no computation to x1, so the best
    possible implementation performs zero HBM traffic and simply returns x1.
    """
    del x2
    return x1


def dropx2_fusion_forward_pallas(x1, x2):
    """Kernel-backed DropX2Fusion.forward (only if a pallas_call must exist).

    Tiled, software-pipelined, input-aliased identity copy over x1.
    x2 is never read -> no HBM traffic for it.
    """
    del x2

    orig_shape = x1.shape
    D = orig_shape[-1]
    x = x1.reshape(-1, D)          # (T, D), T = prod(leading dims)
    T = x.shape[0]

    # Biggest lane-dense tile that fits comfortably in VMEM; if the whole
    # array is smaller than one tile, use the full extent (always legal).
    row_tile = ROW_TILE if T >= ROW_TILE else T
    grid = (pl.cdiv(T, row_tile),)

    bytes_accessed = 2 * T * D * x.dtype.itemsize  # read + write

    out = pl.pallas_call(
        _copy_kernel,
        out_shape=jax.ShapeDtypeStruct((T, D), x.dtype),
        grid=grid,
        in_specs=[pl.BlockSpec((row_tile, D), lambda i: (i, 0))],
        out_specs=pl.BlockSpec((row_tile, D), lambda i: (i, 0)),
        # Output buffer aliases the input buffer: no fresh HBM allocation.
        input_output_aliases={0: 0},
        # Tell XLA this custom call is pure bandwidth (no flops) so it can
        # overlap it with surrounding compute instead of serializing.
        cost_estimate=pl.CostEstimate(
            flops=0, transcendentals=0, bytes_accessed=bytes_accessed),
        compiler_params=pltpu.CompilerParams(
            dimension_semantics=("parallel",),   # megacore / 2-TC sharding on v7x
        ),
    )(x)
    return out.reshape(orig_shape)


if __name__ == "__main__":
    key = jax.random.PRNGKey(0)
    k1, k2 = jax.random.split(key)

    # Shapes consistent with the module: (batch, seq, dim) with dim=512.
    B, N = 2, 8
    x1 = jax.random.normal(k1, (B, N, DIM), jnp.float32)
    x2 = jax.random.normal(k2, (B, N, DIM), jnp.float32)

    # Optimal forward (zero-traffic identity — matches the spec exactly).
    y_fast = dropx2_fusion_forward(x1, x2)
    jax.block_until_ready(y_fast)
    assert y_fast.shape == x1.shape and y_fast.dtype == x1.dtype
    assert bool(jnp.all(y_fast == x1)), "DropX2Fusion must return x1 unchanged"

    # Kernel-backed variant: run the Pallas kernel once and verify.
    y = dropx2_fusion_forward_pallas(x1, x2)
    jax.block_until_ready(y)
    assert y.shape == x1.shape and y.dtype == x1.dtype
    assert bool(jnp.all(y == x1)), "DropX2Fusion must return x1 unchanged"

    print("KERNEL_OK")
</pallas_src>

<mosaic_0001>
module attributes {stable_mosaic.version = 11 : i64} {
  func.func @_copy_kernel(%arg0: i32, %arg1: memref<16x512xf32, #tpu.memory_space<vmem>>, %arg2: memref<16x512xf32, #tpu.memory_space<vmem>>) attributes {dimension_semantics = [#tpu.dimension_semantics<parallel>], iteration_bounds = array<i64: 1>, scalar_prefetch = 0 : i64, scratch_operands = 0 : i64, tpu.core_type = #tpu.core_type<tc>, window_params = [{transform_indices = @transform_0, window_bounds = array<i64: 16, 512>}, {transform_indices = @transform_1, window_bounds = array<i64: 16, 512>}]} {
    %c0 = arith.constant 0 : index
    %c0_0 = arith.constant 0 : index
    %0 = vector.load %arg1[%c0, %c0_0] : memref<16x512xf32, #tpu.memory_space<vmem>>, vector<16x512xf32>
    %c0_1 = arith.constant 0 : index
    %c0_2 = arith.constant 0 : index
    %1 = vector.load %arg2[%c0_1, %c0_2] : memref<16x512xf32, #tpu.memory_space<vmem>>, vector<16x512xf32>
    tpu.vector_store %arg2[%c0_1, %c0_2], %0 {strides = array<i32>} : memref<16x512xf32, #tpu.memory_space<vmem>>, vector<16x512xf32>,
    return
  }
  func.func @transform_0(%arg0: i32) -> (i32, i32) {
    %c0_i32 = arith.constant 0 : i32
    %c0_i32_0 = arith.constant 0 : i32
    return %arg0, %c0_i32 : i32, i32
  }
  func.func @transform_1(%arg0: i32) -> (i32, i32) {
    %c0_i32 = arith.constant 0 : i32
    %c0_i32_0 = arith.constant 0 : i32
    return %arg0, %c0_i32 : i32, i32
  }
}

</mosaic_0001>

<llo_original>
// kernel: tpu_custom_call.1
$region0: #{tpu_custom_call.1}
  #allocation0 [shape = 'u32[]', space=smem, size = 0x4, offset = 0x4, fixed_abs, tag = 'smem constant byte address 0x4 - core index']
  #allocation1 [shape = 'u32[72,128]{1,0:T(1,128)}', space=vmem, size = 0x9000, scoped, tag = 'internal scratch']
  %s0 = inlined_call_operand.hbm [shape: f32[16,512], index: 0, kind: input, shape index: {}, may-alias: {0,1}]
  %s1 = inlined_call_operand.hbm [shape: f32[16,512], index: 1, kind: output, shape index: {}, may-alias: {0,1}]
  %s2 = sld [smem:[#allocation0]]
  $region18: #{tpu_custom_call.1} parent=0
    _
  %s4 = ssub.s32 1, %s2
  %s5 = scalar_select 0, %s4, %s2
  $region1: #{tpu_custom_call.1} parent=0
    #allocation2 [shape = 'u8[32768]{0}', space=vmem, size = 0x8000, scoped, tag = 'input window, operand 0, single buffered']
    #allocation3 [shape = 's32[1]{0}', space=sflag, size = 0x4, scoped, tag = 'scoped memory for tpu_custom_call.1']
    #allocation4 [shape = 's32[1]{0}', space=sflag, size = 0x4, scoped, tag = 'scoped memory for tpu_custom_call.1']
    #allocation5 [shape = 'u8[32768]{0}', space=vmem, size = 0x8000, scoped, tag = 'output window, operand 0, single buffered']
    %6 = vsyncpa [#allocation3], 0
    %7 = vsyncpa [#allocation4], 0
    // Predicated region
    $region2: #{tpu_custom_call.1} parent=1 // pred_check
      _
    $region3: #{tpu_custom_call.1} parent=1 // pred_check_branch
      %9 = sbr.rel (0) target = $region5
    $region4: #{tpu_custom_call.1} parent=1 // pred_region
      %11 = vsyncadd [#allocation3], 0
      %s12 = sshll.u32 %s0, 4
      %s13 = int_to_ptr.hbm [resolvable:$true] %s12
      %s14 = sshll.u32 [#allocation2], 4
      %s15 = int_to_ptr.vmem [resolvable:$true] %s14
      %20 = dma.hbm_to_vmem [thread:$0]  %s13, 1024, %s15, [#allocation3], 512, 512, 32
    $region5: #{tpu_custom_call.1} parent=1 // pred_fallthru
      _
    // Predicated region
    $region6: #{tpu_custom_call.1} parent=1 // pred_check
      _
    $region7: #{tpu_custom_call.1} parent=1 // pred_check_branch
      %22 = sbr.rel (0) target = $region9
    $region8: #{tpu_custom_call.1} parent=1 // pred_region
      %24 = dma.done [#allocation3], 1024
    $region9: #{tpu_custom_call.1} parent=1 // pred_fallthru
      _
    %v25 = vld [vmem:[#allocation2] sm:$0xff]
    %v26 = vld [vmem:[#allocation2 + $0x8] sm:$0xff]
    %v27 = vld [vmem:[#allocation2 + $0x10] sm:$0xff]
    %v28 = vld [vmem:[#allocation2 + $0x18] sm:$0xff]
    %v29 = vld [vmem:[#allocation2 + $0x20] sm:$0xff]
    %v30 = vld [vmem:[#allocation2 + $0x28] sm:$0xff]
    %v31 = vld [vmem:[#allocation2 + $0x30] sm:$0xff]
    %v32 = vld [vmem:[#allocation2 + $0x38] sm:$0xff]
    %33 = vst [vmem:[#allocation5] sm:$0xff] %v25
    %34 = vst [vmem:[#allocation5 + $0x8] sm:$0xff] %v26
    %35 = vst [vmem:[#allocation5 + $0x10] sm:$0xff] %v27
    %36 = vst [vmem:[#allocation5 + $0x18] sm:$0xff] %v28
    %37 = vst [vmem:[#allocation5 + $0x20] sm:$0xff] %v29
    %38 = vst [vmem:[#allocation5 + $0x28] sm:$0xff] %v30
    %39 = vst [vmem:[#allocation5 + $0x30] sm:$0xff] %v31
    %40 = vst [vmem:[#allocation5 + $0x38] sm:$0xff] %v32
    // Predicated region
    $region10: #{tpu_custom_call.1} parent=1 // pred_check
      _
    $region11: #{tpu_custom_call.1} parent=1 // pred_check_branch
      %42 = sbr.rel (0) target = $region13
    $region12: #{tpu_custom_call.1} parent=1 // pred_region
      %44 = vsyncadd [#allocation4], 0
      %s45 = sshll.u32 [#allocation5], 4
      %s46 = int_to_ptr.vmem [resolvable:$true] %s45
      %s47 = sshll.u32 %s1, 4
      %s48 = int_to_ptr.hbm [resolvable:$true] %s47
      %53 = dma.vmem_to_hbm [thread:$0]  %s46, 1024, %s48, [#allocation4], 512, 512, 32
    $region13: #{tpu_custom_call.1} parent=1 // pred_fallthru
      _
    // Predicated region
    $region14: #{tpu_custom_call.1} parent=1 // pred_check
      _
    $region15: #{tpu_custom_call.1} parent=1 // pred_check_branch
      %55 = sbr.rel (0) target = $region17
    $region16: #{tpu_custom_call.1} parent=1 // pred_region
      %57 = dma.done [#allocation4], 1024
    $region17: #{tpu_custom_call.1} parent=1 // pred_fallthru
      _
    %58 = vsyncpa [#allocation3], 1
    %59 = vsyncpa [#allocation4], 1

</llo_original>
